<compile_context>
chip_gen: v7x
topology: tpu7x:2x2x1
jax: 0.10.0
libtpu: 0.0.40
codegen_flags: <defaults>
</compile_context>

<pallas_src>
import functools

import numpy as np
import jax
import jax.numpy as jnp
from jax.experimental import pallas as pl
from jax.experimental.pallas import tpu as pltpu

OUTPUT_SIZES = (2, 3, 6)


def _adaptive_windows(in_size, out_size):
    """PyTorch AdaptiveMaxPool boundaries: [floor(i*S/s), ceil((i+1)*S/s))."""
    starts = [(i * in_size) // out_size for i in range(out_size)]
    ends = [-(-((i + 1) * in_size) // out_size) for i in range(out_size)]
    return list(zip(starts, ends))


def _round_up(a, b):
    return ((a + b - 1) // b) * b


def _spp_kernel(x_ref, o_ref, *, h, w, output_sizes):
    # x_ref: (TILE_NC, H*W), o_ref: (TILE_NC, sum(s*s)).
    x = x_ref[...]
    # Slice each image row once (shared across all scales / windows).
    rows = [x[:, r * w:(r + 1) * w] for r in range(h)]  # each (TILE_NC, W)

    col = 0
    for s in output_sizes:
        h_wins = _adaptive_windows(h, s)
        w_wins = _adaptive_windows(w, s)
        for i, (hs, he) in enumerate(h_wins):
            # Separable stage 1: H-window reduction as elementwise VPU maxima
            # over row slabs (no cross-sublane/XLU reduction).
            hmax = rows[hs]
            for r in range(hs + 1, he):
                hmax = jnp.maximum(hmax, rows[r])
            # Separable stage 2: narrow (<= ceil(W/s)-lane) W-window reduction
            # and a direct column store into the combined output block.
            for j, (ws, we) in enumerate(w_wins):
                cell = jnp.max(hmax[:, ws:we], axis=1, keepdims=True)
                idx = col + i * s + j
                o_ref[:, idx:idx + 1] = cell.astype(o_ref.dtype)
        col += s * s


def spatial_pyramid_pooling(x, output_sizes=OUTPUT_SIZES):
    """x: (N, C, H, W) like PyTorch NCHW. Returns 1-D concat of flattened pools."""
    n, c, h, w = x.shape
    nc = n * c
    hw = h * w
    itemsize = jnp.dtype(x.dtype).itemsize
    total_cols = sum(s * s for s in output_sizes)

    x2 = x.reshape(nc, hw)  # free view: NCHW is contiguous.

    # Sublane granularity: 8 rows for 32-bit dtypes, 16 for bf16, 32 for int8.
    sublane = 8 * max(1, 4 // itemsize)
    # ~4 MiB per input buffer -> 8 MiB double-buffered: fits the scoped VMEM
    # budget with headroom on v5e/v6e (128 MiB) and v7x (64 MiB physical).
    target_bytes = 4 << 20
    tile_nc = max(sublane,
                  (target_bytes // max(1, hw * itemsize)) // sublane * sublane)
    tile_nc = min(tile_nc, _round_up(nc, sublane))

    nc_pad = _round_up(nc, tile_nc)
    if nc_pad != nc:
        x2 = jnp.pad(x2, ((0, nc_pad - nc), (0, 0)))

    kernel = functools.partial(
        _spp_kernel, h=h, w=w, output_sizes=tuple(output_sizes))

    out2 = pl.pallas_call(
        kernel,
        grid=(nc_pad // tile_nc,),
        in_specs=[pl.BlockSpec((tile_nc, hw), lambda i: (i, 0))],
        out_specs=pl.BlockSpec((tile_nc, total_cols), lambda i: (i, 0)),
        out_shape=jax.ShapeDtypeStruct((nc_pad, total_cols), x.dtype),
        compiler_params=pltpu.CompilerParams(
            dimension_semantics=("parallel",),
            vmem_limit_bytes=32 * 1024 * 1024,
        ),
    )(x2)

    # Flatten per scale (row order is (n, c), column order is (i, j) -> matches
    # torch's pooled.flatten()) and concatenate the scales on dim 0.
    pieces = []
    off = 0
    for s in output_sizes:
        pieces.append(out2[:nc, off:off + s * s].reshape(-1))
        off += s * s
    return jnp.concatenate(pieces, axis=0)


def _reference_spp(x_np, output_sizes=OUTPUT_SIZES):
    n, c, h, w = x_np.shape
    outs = []
    for s in output_sizes:
        pooled = np.zeros((n, c, s, s), dtype=x_np.dtype)
        for i, (hs, he) in enumerate(_adaptive_windows(h, s)):
            for j, (ws, we) in enumerate(_adaptive_windows(w, s)):
                pooled[:, :, i, j] = x_np[:, :, hs:he, ws:we].max(axis=(2, 3))
        outs.append(pooled.reshape(-1))
    return np.concatenate(outs, axis=0)


if __name__ == "__main__":
    key = jax.random.PRNGKey(0)
    x = jax.random.normal(key, (2, 4, 16, 16), dtype=jnp.float32)

    out = spatial_pyramid_pooling(x)
    out = jax.block_until_ready(out)

    ref = _reference_spp(np.asarray(x))
    assert out.shape == ref.shape, (out.shape, ref.shape)
    assert np.allclose(np.asarray(out), ref, atol=1e-6), "mismatch vs reference"

    print("KERNEL_OK")
</pallas_src>

<mosaic_0001>
module attributes {stable_mosaic.version = 11 : i64} {
  func.func @_spp_kernel(%arg0: i32, %arg1: memref<8x256xf32, #tpu.memory_space<vmem>>, %arg2: memref<8x49xf32, #tpu.memory_space<vmem>>) attributes {dimension_semantics = [#tpu.dimension_semantics<parallel>], iteration_bounds = array<i64: 1>, scalar_prefetch = 0 : i64, scratch_operands = 0 : i64, tpu.core_type = #tpu.core_type<tc>, window_params = [{transform_indices = @transform_0, window_bounds = array<i64: 8, 256>}, {transform_indices = @transform_1, window_bounds = array<i64: 8, 49>}]} {
    %c0 = arith.constant 0 : index
    %c0_0 = arith.constant 0 : index
    %0 = vector.load %arg1[%c0, %c0_0] : memref<8x256xf32, #tpu.memory_space<vmem>>, vector<8x256xf32>
    %1 = vector.extract_strided_slice %0 {offsets = [0, 0], sizes = [8, 16], strides = [1, 1]} : vector<8x256xf32> to vector<8x16xf32>
    %2 = vector.extract_strided_slice %0 {offsets = [0, 16], sizes = [8, 16], strides = [1, 1]} : vector<8x256xf32> to vector<8x16xf32>
    %3 = vector.extract_strided_slice %0 {offsets = [0, 32], sizes = [8, 16], strides = [1, 1]} : vector<8x256xf32> to vector<8x16xf32>
    %4 = vector.extract_strided_slice %0 {offsets = [0, 48], sizes = [8, 16], strides = [1, 1]} : vector<8x256xf32> to vector<8x16xf32>
    %5 = vector.extract_strided_slice %0 {offsets = [0, 64], sizes = [8, 16], strides = [1, 1]} : vector<8x256xf32> to vector<8x16xf32>
    %6 = vector.extract_strided_slice %0 {offsets = [0, 80], sizes = [8, 16], strides = [1, 1]} : vector<8x256xf32> to vector<8x16xf32>
    %7 = vector.extract_strided_slice %0 {offsets = [0, 96], sizes = [8, 16], strides = [1, 1]} : vector<8x256xf32> to vector<8x16xf32>
    %8 = vector.extract_strided_slice %0 {offsets = [0, 112], sizes = [8, 16], strides = [1, 1]} : vector<8x256xf32> to vector<8x16xf32>
    %9 = vector.extract_strided_slice %0 {offsets = [0, 128], sizes = [8, 16], strides = [1, 1]} : vector<8x256xf32> to vector<8x16xf32>
    %10 = vector.extract_strided_slice %0 {offsets = [0, 144], sizes = [8, 16], strides = [1, 1]} : vector<8x256xf32> to vector<8x16xf32>
    %11 = vector.extract_strided_slice %0 {offsets = [0, 160], sizes = [8, 16], strides = [1, 1]} : vector<8x256xf32> to vector<8x16xf32>
    %12 = vector.extract_strided_slice %0 {offsets = [0, 176], sizes = [8, 16], strides = [1, 1]} : vector<8x256xf32> to vector<8x16xf32>
    %13 = vector.extract_strided_slice %0 {offsets = [0, 192], sizes = [8, 16], strides = [1, 1]} : vector<8x256xf32> to vector<8x16xf32>
    %14 = vector.extract_strided_slice %0 {offsets = [0, 208], sizes = [8, 16], strides = [1, 1]} : vector<8x256xf32> to vector<8x16xf32>
    %15 = vector.extract_strided_slice %0 {offsets = [0, 224], sizes = [8, 16], strides = [1, 1]} : vector<8x256xf32> to vector<8x16xf32>
    %16 = vector.extract_strided_slice %0 {offsets = [0, 240], sizes = [8, 16], strides = [1, 1]} : vector<8x256xf32> to vector<8x16xf32>
    %17 = arith.maximumf %1, %2 : vector<8x16xf32>
    %18 = arith.maximumf %17, %3 : vector<8x16xf32>
    %19 = arith.maximumf %18, %4 : vector<8x16xf32>
    %20 = arith.maximumf %19, %5 : vector<8x16xf32>
    %21 = arith.maximumf %20, %6 : vector<8x16xf32>
    %22 = arith.maximumf %21, %7 : vector<8x16xf32>
    %23 = arith.maximumf %22, %8 : vector<8x16xf32>
    %24 = vector.extract_strided_slice %23 {offsets = [0, 0], sizes = [8, 8], strides = [1, 1]} : vector<8x16xf32> to vector<8x8xf32>
    %cst = arith.constant dense<0xFF800000> : vector<8xf32>
    %25 = vector.multi_reduction <maximumf>, %24, %cst [1] : vector<8x8xf32> to vector<8xf32>
    %26 = vector.shape_cast %25 : vector<8xf32> to vector<8x1xf32>
    %c0_1 = arith.constant 0 : index
    %c0_2 = arith.constant 0 : index
    %27 = vector.load %arg2[%c0_1, %c0_2] : memref<8x49xf32, #tpu.memory_space<vmem>>, vector<8x1xf32>
    tpu.vector_store %arg2[%c0_1, %c0_2], %26 {strides = array<i32>} : memref<8x49xf32, #tpu.memory_space<vmem>>, vector<8x1xf32>,
    %28 = vector.extract_strided_slice %23 {offsets = [0, 8], sizes = [8, 8], strides = [1, 1]} : vector<8x16xf32> to vector<8x8xf32>
    %cst_3 = arith.constant dense<0xFF800000> : vector<8xf32>
    %29 = vector.multi_reduction <maximumf>, %28, %cst_3 [1] : vector<8x8xf32> to vector<8xf32>
    %30 = vector.shape_cast %29 : vector<8xf32> to vector<8x1xf32>
    %c0_4 = arith.constant 0 : index
    %c1 = arith.constant 1 : index
    %31 = vector.load %arg2[%c0_4, %c1] : memref<8x49xf32, #tpu.memory_space<vmem>>, vector<8x1xf32>
    tpu.vector_store %arg2[%c0_4, %c1], %30 {strides = array<i32>} : memref<8x49xf32, #tpu.memory_space<vmem>>, vector<8x1xf32>,
    %32 = arith.maximumf %9, %10 : vector<8x16xf32>
    %33 = arith.maximumf %32, %11 : vector<8x16xf32>
    %34 = arith.maximumf %33, %12 : vector<8x16xf32>
    %35 = arith.maximumf %34, %13 : vector<8x16xf32>
    %36 = arith.maximumf %35, %14 : vector<8x16xf32>
    %37 = arith.maximumf %36, %15 : vector<8x16xf32>
    %38 = arith.maximumf %37, %16 : vector<8x16xf32>
    %39 = vector.extract_strided_slice %38 {offsets = [0, 0], sizes = [8, 8], strides = [1, 1]} : vector<8x16xf32> to vector<8x8xf32>
    %cst_5 = arith.constant dense<0xFF800000> : vector<8xf32>
    %40 = vector.multi_reduction <maximumf>, %39, %cst_5 [1] : vector<8x8xf32> to vector<8xf32>
    %41 = vector.shape_cast %40 : vector<8xf32> to vector<8x1xf32>
    %c0_6 = arith.constant 0 : index
    %c2 = arith.constant 2 : index
    %42 = vector.load %arg2[%c0_6, %c2] : memref<8x49xf32, #tpu.memory_space<vmem>>, vector<8x1xf32>
    tpu.vector_store %arg2[%c0_6, %c2], %41 {strides = array<i32>} : memref<8x49xf32, #tpu.memory_space<vmem>>, vector<8x1xf32>,
    %43 = vector.extract_strided_slice %38 {offsets = [0, 8], sizes = [8, 8], strides = [1, 1]} : vector<8x16xf32> to vector<8x8xf32>
    %cst_7 = arith.constant dense<0xFF800000> : vector<8xf32>
    %44 = vector.multi_reduction <maximumf>, %43, %cst_7 [1] : vector<8x8xf32> to vector<8xf32>
    %45 = vector.shape_cast %44 : vector<8xf32> to vector<8x1xf32>
    %c0_8 = arith.constant 0 : index
    %c3 = arith.constant 3 : index
    %46 = vector.load %arg2[%c0_8, %c3] : memref<8x49xf32, #tpu.memory_space<vmem>>, vector<8x1xf32>
    tpu.vector_store %arg2[%c0_8, %c3], %45 {strides = array<i32>} : memref<8x49xf32, #tpu.memory_space<vmem>>, vector<8x1xf32>,
    %47 = arith.maximumf %1, %2 : vector<8x16xf32>
    %48 = arith.maximumf %47, %3 : vector<8x16xf32>
    %49 = arith.maximumf %48, %4 : vector<8x16xf32>
    %50 = arith.maximumf %49, %5 : vector<8x16xf32>
    %51 = arith.maximumf %50, %6 : vector<8x16xf32>
    %52 = vector.extract_strided_slice %51 {offsets = [0, 0], sizes = [8, 6], strides = [1, 1]} : vector<8x16xf32> to vector<8x6xf32>
    %cst_9 = arith.constant dense<0xFF800000> : vector<8xf32>
    %53 = vector.multi_reduction <maximumf>, %52, %cst_9 [1] : vector<8x6xf32> to vector<8xf32>
    %54 = vector.shape_cast %53 : vector<8xf32> to vector<8x1xf32>
    %c0_10 = arith.constant 0 : index
    %c4 = arith.constant 4 : index
    %55 = vector.load %arg2[%c0_10, %c4] : memref<8x49xf32, #tpu.memory_space<vmem>>, vector<8x1xf32>
    tpu.vector_store %arg2[%c0_10, %c4], %54 {strides = array<i32>} : memref<8x49xf32, #tpu.memory_space<vmem>>, vector<8x1xf32>,
    %56 = vector.extract_strided_slice %51 {offsets = [0, 5], sizes = [8, 6], strides = [1, 1]} : vector<8x16xf32> to vector<8x6xf32>
    %cst_11 = arith.constant dense<0xFF800000> : vector<8xf32>
    %57 = vector.multi_reduction <maximumf>, %56, %cst_11 [1] : vector<8x6xf32> to vector<8xf32>
    %58 = vector.shape_cast %57 : vector<8xf32> to vector<8x1xf32>
    %c0_12 = arith.constant 0 : index
    %c5 = arith.constant 5 : index
    %59 = vector.load %arg2[%c0_12, %c5] : memref<8x49xf32, #tpu.memory_space<vmem>>, vector<8x1xf32>
    tpu.vector_store %arg2[%c0_12, %c5], %58 {strides = array<i32>} : memref<8x49xf32, #tpu.memory_space<vmem>>, vector<8x1xf32>,
    %60 = vector.extract_strided_slice %51 {offsets = [0, 10], sizes = [8, 6], strides = [1, 1]} : vector<8x16xf32> to vector<8x6xf32>
    %cst_13 = arith.constant dense<0xFF800000> : vector<8xf32>
    %61 = vector.multi_reduction <maximumf>, %60, %cst_13 [1] : vector<8x6xf32> to vector<8xf32>
    %62 = vector.shape_cast %61 : vector<8xf32> to vector<8x1xf32>
    %c0_14 = arith.constant 0 : index
    %c6 = arith.constant 6 : index
    %63 = vector.load %arg2[%c0_14, %c6] : memref<8x49xf32, #tpu.memory_space<vmem>>, vector<8x1xf32>
    tpu.vector_store %arg2[%c0_14, %c6], %62 {strides = array<i32>} : memref<8x49xf32, #tpu.memory_space<vmem>>, vector<8x1xf32>,
    %64 = arith.maximumf %6, %7 : vector<8x16xf32>
    %65 = arith.maximumf %64, %8 : vector<8x16xf32>
    %66 = arith.maximumf %65, %9 : vector<8x16xf32>
    %67 = arith.maximumf %66, %10 : vector<8x16xf32>
    %68 = arith.maximumf %67, %11 : vector<8x16xf32>
    %69 = vector.extract_strided_slice %68 {offsets = [0, 0], sizes = [8, 6], strides = [1, 1]} : vector<8x16xf32> to vector<8x6xf32>
    %cst_15 = arith.constant dense<0xFF800000> : vector<8xf32>
    %70 = vector.multi_reduction <maximumf>, %69, %cst_15 [1] : vector<8x6xf32> to vector<8xf32>
    %71 = vector.shape_cast %70 : vector<8xf32> to vector<8x1xf32>
    %c0_16 = arith.constant 0 : index
    %c7 = arith.constant 7 : index
    %72 = vector.load %arg2[%c0_16, %c7] : memref<8x49xf32, #tpu.memory_space<vmem>>, vector<8x1xf32>
    tpu.vector_store %arg2[%c0_16, %c7], %71 {strides = array<i32>} : memref<8x49xf32, #tpu.memory_space<vmem>>, vector<8x1xf32>,
    %73 = vector.extract_strided_slice %68 {offsets = [0, 5], sizes = [8, 6], strides = [1, 1]} : vector<8x16xf32> to vector<8x6xf32>
    %cst_17 = arith.constant dense<0xFF800000> : vector<8xf32>
    %74 = vector.multi_reduction <maximumf>, %73, %cst_17 [1] : vector<8x6xf32> to vector<8xf32>
    %75 = vector.shape_cast %74 : vector<8xf32> to vector<8x1xf32>
    %c0_18 = arith.constant 0 : index
    %c8 = arith.constant 8 : index
    %76 = vector.load %arg2[%c0_18, %c8] : memref<8x49xf32, #tpu.memory_space<vmem>>, vector<8x1xf32>
    tpu.vector_store %arg2[%c0_18, %c8], %75 {strides = array<i32>} : memref<8x49xf32, #tpu.memory_space<vmem>>, vector<8x1xf32>,
    %77 = vector.extract_strided_slice %68 {offsets = [0, 10], sizes = [8, 6], strides = [1, 1]} : vector<8x16xf32> to vector<8x6xf32>
    %cst_19 = arith.constant dense<0xFF800000> : vector<8xf32>
    %78 = vector.multi_reduction <maximumf>, %77, %cst_19 [1] : vector<8x6xf32> to vector<8xf32>
    %79 = vector.shape_cast %78 : vector<8xf32> to vector<8x1xf32>
    %c0_20 = arith.constant 0 : index
    %c9 = arith.constant 9 : index
    %80 = vector.load %arg2[%c0_20, %c9] : memref<8x49xf32, #tpu.memory_space<vmem>>, vector<8x1xf32>
    tpu.vector_store %arg2[%c0_20, %c9], %79 {strides = array<i32>} : memref<8x49xf32, #tpu.memory_space<vmem>>, vector<8x1xf32>,
    %81 = arith.maximumf %11, %12 : vector<8x16xf32>
    %82 = arith.maximumf %81, %13 : vector<8x16xf32>
    %83 = arith.maximumf %82, %14 : vector<8x16xf32>
    %84 = arith.maximumf %83, %15 : vector<8x16xf32>
    %85 = arith.maximumf %84, %16 : vector<8x16xf32>
    %86 = vector.extract_strided_slice %85 {offsets = [0, 0], sizes = [8, 6], strides = [1, 1]} : vector<8x16xf32> to vector<8x6xf32>
    %cst_21 = arith.constant dense<0xFF800000> : vector<8xf32>
    %87 = vector.multi_reduction <maximumf>, %86, %cst_21 [1] : vector<8x6xf32> to vector<8xf32>
    %88 = vector.shape_cast %87 : vector<8xf32> to vector<8x1xf32>
    %c0_22 = arith.constant 0 : index
    %c10 = arith.constant 10 : index
    %89 = vector.load %arg2[%c0_22, %c10] : memref<8x49xf32, #tpu.memory_space<vmem>>, vector<8x1xf32>
    tpu.vector_store %arg2[%c0_22, %c10], %88 {strides = array<i32>} : memref<8x49xf32, #tpu.memory_space<vmem>>, vector<8x1xf32>,
    %90 = vector.extract_strided_slice %85 {offsets = [0, 5], sizes = [8, 6], strides = [1, 1]} : vector<8x16xf32> to vector<8x6xf32>
    %cst_23 = arith.constant dense<0xFF800000> : vector<8xf32>
    %91 = vector.multi_reduction <maximumf>, %90, %cst_23 [1] : vector<8x6xf32> to vector<8xf32>
    %92 = vector.shape_cast %91 : vector<8xf32> to vector<8x1xf32>
    %c0_24 = arith.constant 0 : index
    %c11 = arith.constant 11 : index
    %93 = vector.load %arg2[%c0_24, %c11] : memref<8x49xf32, #tpu.memory_space<vmem>>, vector<8x1xf32>
    tpu.vector_store %arg2[%c0_24, %c11], %92 {strides = array<i32>} : memref<8x49xf32, #tpu.memory_space<vmem>>, vector<8x1xf32>,
    %94 = vector.extract_strided_slice %85 {offsets = [0, 10], sizes = [8, 6], strides = [1, 1]} : vector<8x16xf32> to vector<8x6xf32>
    %cst_25 = arith.constant dense<0xFF800000> : vector<8xf32>
    %95 = vector.multi_reduction <maximumf>, %94, %cst_25 [1] : vector<8x6xf32> to vector<8xf32>
    %96 = vector.shape_cast %95 : vector<8xf32> to vector<8x1xf32>
    %c0_26 = arith.constant 0 : index
    %c12 = arith.constant 12 : index
    %97 = vector.load %arg2[%c0_26, %c12] : memref<8x49xf32, #tpu.memory_space<vmem>>, vector<8x1xf32>
    tpu.vector_store %arg2[%c0_26, %c12], %96 {strides = array<i32>} : memref<8x49xf32, #tpu.memory_space<vmem>>, vector<8x1xf32>,
    %98 = arith.maximumf %1, %2 : vector<8x16xf32>
    %99 = arith.maximumf %98, %3 : vector<8x16xf32>
    %100 = vector.extract_strided_slice %99 {offsets = [0, 0], sizes = [8, 3], strides = [1, 1]} : vector<8x16xf32> to vector<8x3xf32>
    %cst_27 = arith.constant dense<0xFF800000> : vector<8xf32>
    %101 = vector.multi_reduction <maximumf>, %100, %cst_27 [1] : vector<8x3xf32> to vector<8xf32>
    %102 = vector.shape_cast %101 : vector<8xf32> to vector<8x1xf32>
    %c0_28 = arith.constant 0 : index
    %c13 = arith.constant 13 : index
    %103 = vector.load %arg2[%c0_28, %c13] : memref<8x49xf32, #tpu.memory_space<vmem>>, vector<8x1xf32>
    tpu.vector_store %arg2[%c0_28, %c13], %102 {strides = array<i32>} : memref<8x49xf32, #tpu.memory_space<vmem>>, vector<8x1xf32>,
    %104 = vector.extract_strided_slice %99 {offsets = [0, 2], sizes = [8, 4], strides = [1, 1]} : vector<8x16xf32> to vector<8x4xf32>
    %cst_29 = arith.constant dense<0xFF800000> : vector<8xf32>
    %105 = vector.multi_reduction <maximumf>, %104, %cst_29 [1] : vector<8x4xf32> to vector<8xf32>
    %106 = vector.shape_cast %105 : vector<8xf32> to vector<8x1xf32>
    %c0_30 = arith.constant 0 : index
    %c14 = arith.constant 14 : index
    %107 = vector.load %arg2[%c0_30, %c14] : memref<8x49xf32, #tpu.memory_space<vmem>>, vector<8x1xf32>
    tpu.vector_store %arg2[%c0_30, %c14], %106 {strides = array<i32>} : memref<8x49xf32, #tpu.memory_space<vmem>>, vector<8x1xf32>,
    %108 = vector.extract_strided_slice %99 {offsets = [0, 5], sizes = [8, 3], strides = [1, 1]} : vector<8x16xf32> to vector<8x3xf32>
    %cst_31 = arith.constant dense<0xFF800000> : vector<8xf32>
    %109 = vector.multi_reduction <maximumf>, %108, %cst_31 [1] : vector<8x3xf32> to vector<8xf32>
    %110 = vector.shape_cast %109 : vector<8xf32> to vector<8x1xf32>
    %c0_32 = arith.constant 0 : index
    %c15 = arith.constant 15 : index
    %111 = vector.load %arg2[%c0_32, %c15] : memref<8x49xf32, #tpu.memory_space<vmem>>, vector<8x1xf32>
    tpu.vector_store %arg2[%c0_32, %c15], %110 {strides = array<i32>} : memref<8x49xf32, #tpu.memory_space<vmem>>, vector<8x1xf32>,
    %112 = vector.extract_strided_slice %99 {offsets = [0, 8], sizes = [8, 3], strides = [1, 1]} : vector<8x16xf32> to vector<8x3xf32>
    %cst_33 = arith.constant dense<0xFF800000> : vector<8xf32>
    %113 = vector.multi_reduction <maximumf>, %112, %cst_33 [1] : vector<8x3xf32> to vector<8xf32>
    %114 = vector.shape_cast %113 : vector<8xf32> to vector<8x1xf32>
    %c0_34 = arith.constant 0 : index
    %c16 = arith.constant 16 : index
    %115 = vector.load %arg2[%c0_34, %c16] : memref<8x49xf32, #tpu.memory_space<vmem>>, vector<8x1xf32>
    tpu.vector_store %arg2[%c0_34, %c16], %114 {strides = array<i32>} : memref<8x49xf32, #tpu.memory_space<vmem>>, vector<8x1xf32>,
    %116 = vector.extract_strided_slice %99 {offsets = [0, 10], sizes = [8, 4], strides = [1, 1]} : vector<8x16xf32> to vector<8x4xf32>
    %cst_35 = arith.constant dense<0xFF800000> : vector<8xf32>
    %117 = vector.multi_reduction <maximumf>, %116, %cst_35 [1] : vector<8x4xf32> to vector<8xf32>
    %118 = vector.shape_cast %117 : vector<8xf32> to vector<8x1xf32>
    %c0_36 = arith.constant 0 : index
    %c17 = arith.constant 17 : index
    %119 = vector.load %arg2[%c0_36, %c17] : memref<8x49xf32, #tpu.memory_space<vmem>>, vector<8x1xf32>
    tpu.vector_store %arg2[%c0_36, %c17], %118 {strides = array<i32>} : memref<8x49xf32, #tpu.memory_space<vmem>>, vector<8x1xf32>,
    %120 = vector.extract_strided_slice %99 {offsets = [0, 13], sizes = [8, 3], strides = [1, 1]} : vector<8x16xf32> to vector<8x3xf32>
    %cst_37 = arith.constant dense<0xFF800000> : vector<8xf32>
    %121 = vector.multi_reduction <maximumf>, %120, %cst_37 [1] : vector<8x3xf32> to vector<8xf32>
    %122 = vector.shape_cast %121 : vector<8xf32> to vector<8x1xf32>
    %c0_38 = arith.constant 0 : index
    %c18 = arith.constant 18 : index
    %123 = vector.load %arg2[%c0_38, %c18] : memref<8x49xf32, #tpu.memory_space<vmem>>, vector<8x1xf32>
    tpu.vector_store %arg2[%c0_38, %c18], %122 {strides = array<i32>} : memref<8x49xf32, #tpu.memory_space<vmem>>, vector<8x1xf32>,
    %124 = arith.maximumf %3, %4 : vector<8x16xf32>
    %125 = arith.maximumf %124, %5 : vector<8x16xf32>
    %126 = arith.maximumf %125, %6 : vector<8x16xf32>
    %127 = vector.extract_strided_slice %126 {offsets = [0, 0], sizes = [8, 3], strides = [1, 1]} : vector<8x16xf32> to vector<8x3xf32>
    %cst_39 = arith.constant dense<0xFF800000> : vector<8xf32>
    %128 = vector.multi_reduction <maximumf>, %127, %cst_39 [1] : vector<8x3xf32> to vector<8xf32>
    %129 = vector.shape_cast %128 : vector<8xf32> to vector<8x1xf32>
    %c0_40 = arith.constant 0 : index
    %c19 = arith.constant 19 : index
    %130 = vector.load %arg2[%c0_40, %c19] : memref<8x49xf32, #tpu.memory_space<vmem>>, vector<8x1xf32>
    tpu.vector_store %arg2[%c0_40, %c19], %129 {strides = array<i32>} : memref<8x49xf32, #tpu.memory_space<vmem>>, vector<8x1xf32>,
    %131 = vector.extract_strided_slice %126 {offsets = [0, 2], sizes = [8, 4], strides = [1, 1]} : vector<8x16xf32> to vector<8x4xf32>
    %cst_41 = arith.constant dense<0xFF800000> : vector<8xf32>
    %132 = vector.multi_reduction <maximumf>, %131, %cst_41 [1] : vector<8x4xf32> to vector<8xf32>
    %133 = vector.shape_cast %132 : vector<8xf32> to vector<8x1xf32>
    %c0_42 = arith.constant 0 : index
    %c20 = arith.constant 20 : index
    %134 = vector.load %arg2[%c0_42, %c20] : memref<8x49xf32, #tpu.memory_space<vmem>>, vector<8x1xf32>
    tpu.vector_store %arg2[%c0_42, %c20], %133 {strides = array<i32>} : memref<8x49xf32, #tpu.memory_space<vmem>>, vector<8x1xf32>,
    %135 = vector.extract_strided_slice %126 {offsets = [0, 5], sizes = [8, 3], strides = [1, 1]} : vector<8x16xf32> to vector<8x3xf32>
    %cst_43 = arith.constant dense<0xFF800000> : vector<8xf32>
    %136 = vector.multi_reduction <maximumf>, %135, %cst_43 [1] : vector<8x3xf32> to vector<8xf32>
    %137 = vector.shape_cast %136 : vector<8xf32> to vector<8x1xf32>
    %c0_44 = arith.constant 0 : index
    %c21 = arith.constant 21 : index
    %138 = vector.load %arg2[%c0_44, %c21] : memref<8x49xf32, #tpu.memory_space<vmem>>, vector<8x1xf32>
    tpu.vector_store %arg2[%c0_44, %c21], %137 {strides = array<i32>} : memref<8x49xf32, #tpu.memory_space<vmem>>, vector<8x1xf32>,
    %139 = vector.extract_strided_slice %126 {offsets = [0, 8], sizes = [8, 3], strides = [1, 1]} : vector<8x16xf32> to vector<8x3xf32>
    %cst_45 = arith.constant dense<0xFF800000> : vector<8xf32>
    %140 = vector.multi_reduction <maximumf>, %139, %cst_45 [1] : vector<8x3xf32> to vector<8xf32>
    %141 = vector.shape_cast %140 : vector<8xf32> to vector<8x1xf32>
    %c0_46 = arith.constant 0 : index
    %c22 = arith.constant 22 : index
    %142 = vector.load %arg2[%c0_46, %c22] : memref<8x49xf32, #tpu.memory_space<vmem>>, vector<8x1xf32>
    tpu.vector_store %arg2[%c0_46, %c22], %141 {strides = array<i32>} : memref<8x49xf32, #tpu.memory_space<vmem>>, vector<8x1xf32>,
    %143 = vector.extract_strided_slice %126 {offsets = [0, 10], sizes = [8, 4], strides = [1, 1]} : vector<8x16xf32> to vector<8x4xf32>
    %cst_47 = arith.constant dense<0xFF800000> : vector<8xf32>
    %144 = vector.multi_reduction <maximumf>, %143, %cst_47 [1] : vector<8x4xf32> to vector<8xf32>
    %145 = vector.shape_cast %144 : vector<8xf32> to vector<8x1xf32>
    %c0_48 = arith.constant 0 : index
    %c23 = arith.constant 23 : index
    %146 = vector.load %arg2[%c0_48, %c23] : memref<8x49xf32, #tpu.memory_space<vmem>>, vector<8x1xf32>
    tpu.vector_store %arg2[%c0_48, %c23], %145 {strides = array<i32>} : memref<8x49xf32, #tpu.memory_space<vmem>>, vector<8x1xf32>,
    %147 = vector.extract_strided_slice %126 {offsets = [0, 13], sizes = [8, 3], strides = [1, 1]} : vector<8x16xf32> to vector<8x3xf32>
    %cst_49 = arith.constant dense<0xFF800000> : vector<8xf32>
    %148 = vector.multi_reduction <maximumf>, %147, %cst_49 [1] : vector<8x3xf32> to vector<8xf32>
    %149 = vector.shape_cast %148 : vector<8xf32> to vector<8x1xf32>
    %c0_50 = arith.constant 0 : index
    %c24 = arith.constant 24 : index
    %150 = vector.load %arg2[%c0_50, %c24] : memref<8x49xf32, #tpu.memory_space<vmem>>, vector<8x1xf32>
    tpu.vector_store %arg2[%c0_50, %c24], %149 {strides = array<i32>} : memref<8x49xf32, #tpu.memory_space<vmem>>, vector<8x1xf32>,
    %151 = arith.maximumf %6, %7 : vector<8x16xf32>
    %152 = arith.maximumf %151, %8 : vector<8x16xf32>
    %153 = vector.extract_strided_slice %152 {offsets = [0, 0], sizes = [8, 3], strides = [1, 1]} : vector<8x16xf32> to vector<8x3xf32>
    %cst_51 = arith.constant dense<0xFF800000> : vector<8xf32>
    %154 = vector.multi_reduction <maximumf>, %153, %cst_51 [1] : vector<8x3xf32> to vector<8xf32>
    %155 = vector.shape_cast %154 : vector<8xf32> to vector<8x1xf32>
    %c0_52 = arith.constant 0 : index
    %c25 = arith.constant 25 : index
    %156 = vector.load %arg2[%c0_52, %c25] : memref<8x49xf32, #tpu.memory_space<vmem>>, vector<8x1xf32>
    tpu.vector_store %arg2[%c0_52, %c25], %155 {strides = array<i32>} : memref<8x49xf32, #tpu.memory_space<vmem>>, vector<8x1xf32>,
    %157 = vector.extract_strided_slice %152 {offsets = [0, 2], sizes = [8, 4], strides = [1, 1]} : vector<8x16xf32> to vector<8x4xf32>
    %cst_53 = arith.constant dense<0xFF800000> : vector<8xf32>
    %158 = vector.multi_reduction <maximumf>, %157, %cst_53 [1] : vector<8x4xf32> to vector<8xf32>
    %159 = vector.shape_cast %158 : vector<8xf32> to vector<8x1xf32>
    %c0_54 = arith.constant 0 : index
    %c26 = arith.constant 26 : index
    %160 = vector.load %arg2[%c0_54, %c26] : memref<8x49xf32, #tpu.memory_space<vmem>>, vector<8x1xf32>
    tpu.vector_store %arg2[%c0_54, %c26], %159 {strides = array<i32>} : memref<8x49xf32, #tpu.memory_space<vmem>>, vector<8x1xf32>,
    %161 = vector.extract_strided_slice %152 {offsets = [0, 5], sizes = [8, 3], strides = [1, 1]} : vector<8x16xf32> to vector<8x3xf32>
    %cst_55 = arith.constant dense<0xFF800000> : vector<8xf32>
    %162 = vector.multi_reduction <maximumf>, %161, %cst_55 [1] : vector<8x3xf32> to vector<8xf32>
    %163 = vector.shape_cast %162 : vector<8xf32> to vector<8x1xf32>
    %c0_56 = arith.constant 0 : index
    %c27 = arith.constant 27 : index
    %164 = vector.load %arg2[%c0_56, %c27] : memref<8x49xf32, #tpu.memory_space<vmem>>, vector<8x1xf32>
    tpu.vector_store %arg2[%c0_56, %c27], %163 {strides = array<i32>} : memref<8x49xf32, #tpu.memory_space<vmem>>, vector<8x1xf32>,
    %165 = vector.extract_strided_slice %152 {offsets = [0, 8], sizes = [8, 3], strides = [1, 1]} : vector<8x16xf32> to vector<8x3xf32>
    %cst_57 = arith.constant dense<0xFF800000> : vector<8xf32>
    %166 = vector.multi_reduction <maximumf>, %165, %cst_57 [1] : vector<8x3xf32> to vector<8xf32>
    %167 = vector.shape_cast %166 : vector<8xf32> to vector<8x1xf32>
    %c0_58 = arith.constant 0 : index
    %c28 = arith.constant 28 : index
    %168 = vector.load %arg2[%c0_58, %c28] : memref<8x49xf32, #tpu.memory_space<vmem>>, vector<8x1xf32>
    tpu.vector_store %arg2[%c0_58, %c28], %167 {strides = array<i32>} : memref<8x49xf32, #tpu.memory_space<vmem>>, vector<8x1xf32>,
    %169 = vector.extract_strided_slice %152 {offsets = [0, 10], sizes = [8, 4], strides = [1, 1]} : vector<8x16xf32> to vector<8x4xf32>
    %cst_59 = arith.constant dense<0xFF800000> : vector<8xf32>
    %170 = vector.multi_reduction <maximumf>, %169, %cst_59 [1] : vector<8x4xf32> to vector<8xf32>
    %171 = vector.shape_cast %170 : vector<8xf32> to vector<8x1xf32>
    %c0_60 = arith.constant 0 : index
    %c29 = arith.constant 29 : index
    %172 = vector.load %arg2[%c0_60, %c29] : memref<8x49xf32, #tpu.memory_space<vmem>>, vector<8x1xf32>
    tpu.vector_store %arg2[%c0_60, %c29], %171 {strides = array<i32>} : memref<8x49xf32, #tpu.memory_space<vmem>>, vector<8x1xf32>,
    %173 = vector.extract_strided_slice %152 {offsets = [0, 13], sizes = [8, 3], strides = [1, 1]} : vector<8x16xf32> to vector<8x3xf32>
    %cst_61 = arith.constant dense<0xFF800000> : vector<8xf32>
    %174 = vector.multi_reduction <maximumf>, %173, %cst_61 [1] : vector<8x3xf32> to vector<8xf32>
    %175 = vector.shape_cast %174 : vector<8xf32> to vector<8x1xf32>
    %c0_62 = arith.constant 0 : index
    %c30 = arith.constant 30 : index
    %176 = vector.load %arg2[%c0_62, %c30] : memref<8x49xf32, #tpu.memory_space<vmem>>, vector<8x1xf32>
    tpu.vector_store %arg2[%c0_62, %c30], %175 {strides = array<i32>} : memref<8x49xf32, #tpu.memory_space<vmem>>, vector<8x1xf32>,
    %177 = arith.maximumf %9, %10 : vector<8x16xf32>
    %178 = arith.maximumf %177, %11 : vector<8x16xf32>
    %179 = vector.extract_strided_slice %178 {offsets = [0, 0], sizes = [8, 3], strides = [1, 1]} : vector<8x16xf32> to vector<8x3xf32>
    %cst_63 = arith.constant dense<0xFF800000> : vector<8xf32>
    %180 = vector.multi_reduction <maximumf>, %179, %cst_63 [1] : vector<8x3xf32> to vector<8xf32>
    %181 = vector.shape_cast %180 : vector<8xf32> to vector<8x1xf32>
    %c0_64 = arith.constant 0 : index
    %c31 = arith.constant 31 : index
    %182 = vector.load %arg2[%c0_64, %c31] : memref<8x49xf32, #tpu.memory_space<vmem>>, vector<8x1xf32>
    tpu.vector_store %arg2[%c0_64, %c31], %181 {strides = array<i32>} : memref<8x49xf32, #tpu.memory_space<vmem>>, vector<8x1xf32>,
    %183 = vector.extract_strided_slice %178 {offsets = [0, 2], sizes = [8, 4], strides = [1, 1]} : vector<8x16xf32> to vector<8x4xf32>
    %cst_65 = arith.constant dense<0xFF800000> : vector<8xf32>
    %184 = vector.multi_reduction <maximumf>, %183, %cst_65 [1] : vector<8x4xf32> to vector<8xf32>
    %185 = vector.shape_cast %184 : vector<8xf32> to vector<8x1xf32>
    %c0_66 = arith.constant 0 : index
    %c32 = arith.constant 32 : index
    %186 = vector.load %arg2[%c0_66, %c32] : memref<8x49xf32, #tpu.memory_space<vmem>>, vector<8x1xf32>
    tpu.vector_store %arg2[%c0_66, %c32], %185 {strides = array<i32>} : memref<8x49xf32, #tpu.memory_space<vmem>>, vector<8x1xf32>,
    %187 = vector.extract_strided_slice %178 {offsets = [0, 5], sizes = [8, 3], strides = [1, 1]} : vector<8x16xf32> to vector<8x3xf32>
    %cst_67 = arith.constant dense<0xFF800000> : vector<8xf32>
    %188 = vector.multi_reduction <maximumf>, %187, %cst_67 [1] : vector<8x3xf32> to vector<8xf32>
    %189 = vector.shape_cast %188 : vector<8xf32> to vector<8x1xf32>
    %c0_68 = arith.constant 0 : index
    %c33 = arith.constant 33 : index
    %190 = vector.load %arg2[%c0_68, %c33] : memref<8x49xf32, #tpu.memory_space<vmem>>, vector<8x1xf32>
    tpu.vector_store %arg2[%c0_68, %c33], %189 {strides = array<i32>} : memref<8x49xf32, #tpu.memory_space<vmem>>, vector<8x1xf32>,
    %191 = vector.extract_strided_slice %178 {offsets = [0, 8], sizes = [8, 3], strides = [1, 1]} : vector<8x16xf32> to vector<8x3xf32>
    %cst_69 = arith.constant dense<0xFF800000> : vector<8xf32>
    %192 = vector.multi_reduction <maximumf>, %191, %cst_69 [1] : vector<8x3xf32> to vector<8xf32>
    %193 = vector.shape_cast %192 : vector<8xf32> to vector<8x1xf32>
    %c0_70 = arith.constant 0 : index
    %c34 = arith.constant 34 : index
    %194 = vector.load %arg2[%c0_70, %c34] : memref<8x49xf32, #tpu.memory_space<vmem>>, vector<8x1xf32>
    tpu.vector_store %arg2[%c0_70, %c34], %193 {strides = array<i32>} : memref<8x49xf32, #tpu.memory_space<vmem>>, vector<8x1xf32>,
    %195 = vector.extract_strided_slice %178 {offsets = [0, 10], sizes = [8, 4], strides = [1, 1]} : vector<8x16xf32> to vector<8x4xf32>
    %cst_71 = arith.constant dense<0xFF800000> : vector<8xf32>
    %196 = vector.multi_reduction <maximumf>, %195, %cst_71 [1] : vector<8x4xf32> to vector<8xf32>
    %197 = vector.shape_cast %196 : vector<8xf32> to vector<8x1xf32>
    %c0_72 = arith.constant 0 : index
    %c35 = arith.constant 35 : index
    %198 = vector.load %arg2[%c0_72, %c35] : memref<8x49xf32, #tpu.memory_space<vmem>>, vector<8x1xf32>
    tpu.vector_store %arg2[%c0_72, %c35], %197 {strides = array<i32>} : memref<8x49xf32, #tpu.memory_space<vmem>>, vector<8x1xf32>,
    %199 = vector.extract_strided_slice %178 {offsets = [0, 13], sizes = [8, 3], strides = [1, 1]} : vector<8x16xf32> to vector<8x3xf32>
    %cst_73 = arith.constant dense<0xFF800000> : vector<8xf32>
    %200 = vector.multi_reduction <maximumf>, %199, %cst_73 [1] : vector<8x3xf32> to vector<8xf32>
    %201 = vector.shape_cast %200 : vector<8xf32> to vector<8x1xf32>
    %c0_74 = arith.constant 0 : index
    %c36 = arith.constant 36 : index
    %202 = vector.load %arg2[%c0_74, %c36] : memref<8x49xf32, #tpu.memory_space<vmem>>, vector<8x1xf32>
    tpu.vector_store %arg2[%c0_74, %c36], %201 {strides = array<i32>} : memref<8x49xf32, #tpu.memory_space<vmem>>, vector<8x1xf32>,
    %203 = arith.maximumf %11, %12 : vector<8x16xf32>
    %204 = arith.maximumf %203, %13 : vector<8x16xf32>
    %205 = arith.maximumf %204, %14 : vector<8x16xf32>
    %206 = vector.extract_strided_slice %205 {offsets = [0, 0], sizes = [8, 3], strides = [1, 1]} : vector<8x16xf32> to vector<8x3xf32>
    %cst_75 = arith.constant dense<0xFF800000> : vector<8xf32>
    %207 = vector.multi_reduction <maximumf>, %206, %cst_75 [1] : vector<8x3xf32> to vector<8xf32>
    %208 = vector.shape_cast %207 : vector<8xf32> to vector<8x1xf32>
    %c0_76 = arith.constant 0 : index
    %c37 = arith.constant 37 : index
    %209 = vector.load %arg2[%c0_76, %c37] : memref<8x49xf32, #tpu.memory_space<vmem>>, vector<8x1xf32>
    tpu.vector_store %arg2[%c0_76, %c37], %208 {strides = array<i32>} : memref<8x49xf32, #tpu.memory_space<vmem>>, vector<8x1xf32>,
    %210 = vector.extract_strided_slice %205 {offsets = [0, 2], sizes = [8, 4], strides = [1, 1]} : vector<8x16xf32> to vector<8x4xf32>
    %cst_77 = arith.constant dense<0xFF800000> : vector<8xf32>
    %211 = vector.multi_reduction <maximumf>, %210, %cst_77 [1] : vector<8x4xf32> to vector<8xf32>
    %212 = vector.shape_cast %211 : vector<8xf32> to vector<8x1xf32>
    %c0_78 = arith.constant 0 : index
    %c38 = arith.constant 38 : index
    %213 = vector.load %arg2[%c0_78, %c38] : memref<8x49xf32, #tpu.memory_space<vmem>>, vector<8x1xf32>
    tpu.vector_store %arg2[%c0_78, %c38], %212 {strides = array<i32>} : memref<8x49xf32, #tpu.memory_space<vmem>>, vector<8x1xf32>,
    %214 = vector.extract_strided_slice %205 {offsets = [0, 5], sizes = [8, 3], strides = [1, 1]} : vector<8x16xf32> to vector<8x3xf32>
    %cst_79 = arith.constant dense<0xFF800000> : vector<8xf32>
    %215 = vector.multi_reduction <maximumf>, %214, %cst_79 [1] : vector<8x3xf32> to vector<8xf32>
    %216 = vector.shape_cast %215 : vector<8xf32> to vector<8x1xf32>
    %c0_80 = arith.constant 0 : index
    %c39 = arith.constant 39 : index
    %217 = vector.load %arg2[%c0_80, %c39] : memref<8x49xf32, #tpu.memory_space<vmem>>, vector<8x1xf32>
    tpu.vector_store %arg2[%c0_80, %c39], %216 {strides = array<i32>} : memref<8x49xf32, #tpu.memory_space<vmem>>, vector<8x1xf32>,
    %218 = vector.extract_strided_slice %205 {offsets = [0, 8], sizes = [8, 3], strides = [1, 1]} : vector<8x16xf32> to vector<8x3xf32>
    %cst_81 = arith.constant dense<0xFF800000> : vector<8xf32>
    %219 = vector.multi_reduction <maximumf>, %218, %cst_81 [1] : vector<8x3xf32> to vector<8xf32>
    %220 = vector.shape_cast %219 : vector<8xf32> to vector<8x1xf32>
    %c0_82 = arith.constant 0 : index
    %c40 = arith.constant 40 : index
    %221 = vector.load %arg2[%c0_82, %c40] : memref<8x49xf32, #tpu.memory_space<vmem>>, vector<8x1xf32>
    tpu.vector_store %arg2[%c0_82, %c40], %220 {strides = array<i32>} : memref<8x49xf32, #tpu.memory_space<vmem>>, vector<8x1xf32>,
    %222 = vector.extract_strided_slice %205 {offsets = [0, 10], sizes = [8, 4], strides = [1, 1]} : vector<8x16xf32> to vector<8x4xf32>
    %cst_83 = arith.constant dense<0xFF800000> : vector<8xf32>
    %223 = vector.multi_reduction <maximumf>, %222, %cst_83 [1] : vector<8x4xf32> to vector<8xf32>
    %224 = vector.shape_cast %223 : vector<8xf32> to vector<8x1xf32>
    %c0_84 = arith.constant 0 : index
    %c41 = arith.constant 41 : index
    %225 = vector.load %arg2[%c0_84, %c41] : memref<8x49xf32, #tpu.memory_space<vmem>>, vector<8x1xf32>
    tpu.vector_store %arg2[%c0_84, %c41], %224 {strides = array<i32>} : memref<8x49xf32, #tpu.memory_space<vmem>>, vector<8x1xf32>,
    %226 = vector.extract_strided_slice %205 {offsets = [0, 13], sizes = [8, 3], strides = [1, 1]} : vector<8x16xf32> to vector<8x3xf32>
    %cst_85 = arith.constant dense<0xFF800000> : vector<8xf32>
    %227 = vector.multi_reduction <maximumf>, %226, %cst_85 [1] : vector<8x3xf32> to vector<8xf32>
    %228 = vector.shape_cast %227 : vector<8xf32> to vector<8x1xf32>
    %c0_86 = arith.constant 0 : index
    %c42 = arith.constant 42 : index
    %229 = vector.load %arg2[%c0_86, %c42] : memref<8x49xf32, #tpu.memory_space<vmem>>, vector<8x1xf32>
    tpu.vector_store %arg2[%c0_86, %c42], %228 {strides = array<i32>} : memref<8x49xf32, #tpu.memory_space<vmem>>, vector<8x1xf32>,
    %230 = arith.maximumf %14, %15 : vector<8x16xf32>
    %231 = arith.maximumf %230, %16 : vector<8x16xf32>
    %232 = vector.extract_strided_slice %231 {offsets = [0, 0], sizes = [8, 3], strides = [1, 1]} : vector<8x16xf32> to vector<8x3xf32>
    %cst_87 = arith.constant dense<0xFF800000> : vector<8xf32>
    %233 = vector.multi_reduction <maximumf>, %232, %cst_87 [1] : vector<8x3xf32> to vector<8xf32>
    %234 = vector.shape_cast %233 : vector<8xf32> to vector<8x1xf32>
    %c0_88 = arith.constant 0 : index
    %c43 = arith.constant 43 : index
    %235 = vector.load %arg2[%c0_88, %c43] : memref<8x49xf32, #tpu.memory_space<vmem>>, vector<8x1xf32>
    tpu.vector_store %arg2[%c0_88, %c43], %234 {strides = array<i32>} : memref<8x49xf32, #tpu.memory_space<vmem>>, vector<8x1xf32>,
    %236 = vector.extract_strided_slice %231 {offsets = [0, 2], sizes = [8, 4], strides = [1, 1]} : vector<8x16xf32> to vector<8x4xf32>
    %cst_89 = arith.constant dense<0xFF800000> : vector<8xf32>
    %237 = vector.multi_reduction <maximumf>, %236, %cst_89 [1] : vector<8x4xf32> to vector<8xf32>
    %238 = vector.shape_cast %237 : vector<8xf32> to vector<8x1xf32>
    %c0_90 = arith.constant 0 : index
    %c44 = arith.constant 44 : index
    %239 = vector.load %arg2[%c0_90, %c44] : memref<8x49xf32, #tpu.memory_space<vmem>>, vector<8x1xf32>
    tpu.vector_store %arg2[%c0_90, %c44], %238 {strides = array<i32>} : memref<8x49xf32, #tpu.memory_space<vmem>>, vector<8x1xf32>,
    %240 = vector.extract_strided_slice %231 {offsets = [0, 5], sizes = [8, 3], strides = [1, 1]} : vector<8x16xf32> to vector<8x3xf32>
    %cst_91 = arith.constant dense<0xFF800000> : vector<8xf32>
    %241 = vector.multi_reduction <maximumf>, %240, %cst_91 [1] : vector<8x3xf32> to vector<8xf32>
    %242 = vector.shape_cast %241 : vector<8xf32> to vector<8x1xf32>
    %c0_92 = arith.constant 0 : index
    %c45 = arith.constant 45 : index
    %243 = vector.load %arg2[%c0_92, %c45] : memref<8x49xf32, #tpu.memory_space<vmem>>, vector<8x1xf32>
    tpu.vector_store %arg2[%c0_92, %c45], %242 {strides = array<i32>} : memref<8x49xf32, #tpu.memory_space<vmem>>, vector<8x1xf32>,
    %244 = vector.extract_strided_slice %231 {offsets = [0, 8], sizes = [8, 3], strides = [1, 1]} : vector<8x16xf32> to vector<8x3xf32>
    %cst_93 = arith.constant dense<0xFF800000> : vector<8xf32>
    %245 = vector.multi_reduction <maximumf>, %244, %cst_93 [1] : vector<8x3xf32> to vector<8xf32>
    %246 = vector.shape_cast %245 : vector<8xf32> to vector<8x1xf32>
    %c0_94 = arith.constant 0 : index
    %c46 = arith.constant 46 : index
    %247 = vector.load %arg2[%c0_94, %c46] : memref<8x49xf32, #tpu.memory_space<vmem>>, vector<8x1xf32>
    tpu.vector_store %arg2[%c0_94, %c46], %246 {strides = array<i32>} : memref<8x49xf32, #tpu.memory_space<vmem>>, vector<8x1xf32>,
    %248 = vector.extract_strided_slice %231 {offsets = [0, 10], sizes = [8, 4], strides = [1, 1]} : vector<8x16xf32> to vector<8x4xf32>
    %cst_95 = arith.constant dense<0xFF800000> : vector<8xf32>
    %249 = vector.multi_reduction <maximumf>, %248, %cst_95 [1] : vector<8x4xf32> to vector<8xf32>
    %250 = vector.shape_cast %249 : vector<8xf32> to vector<8x1xf32>
    %c0_96 = arith.constant 0 : index
    %c47 = arith.constant 47 : index
    %251 = vector.load %arg2[%c0_96, %c47] : memref<8x49xf32, #tpu.memory_space<vmem>>, vector<8x1xf32>
    tpu.vector_store %arg2[%c0_96, %c47], %250 {strides = array<i32>} : memref<8x49xf32, #tpu.memory_space<vmem>>, vector<8x1xf32>,
    %252 = vector.extract_strided_slice %231 {offsets = [0, 13], sizes = [8, 3], strides = [1, 1]} : vector<8x16xf32> to vector<8x3xf32>
    %cst_97 = arith.constant dense<0xFF800000> : vector<8xf32>
    %253 = vector.multi_reduction <maximumf>, %252, %cst_97 [1] : vector<8x3xf32> to vector<8xf32>
    %254 = vector.shape_cast %253 : vector<8xf32> to vector<8x1xf32>
    %c0_98 = arith.constant 0 : index
    %c48 = arith.constant 48 : index
    %255 = vector.load %arg2[%c0_98, %c48] : memref<8x49xf32, #tpu.memory_space<vmem>>, vector<8x1xf32>
    tpu.vector_store %arg2[%c0_98, %c48], %254 {strides = array<i32>} : memref<8x49xf32, #tpu.memory_space<vmem>>, vector<8x1xf32>,
    return
  }
  func.func @transform_0(%arg0: i32) -> (i32, i32) {
    %c0_i32 = arith.constant 0 : i32
    %c0_i32_0 = arith.constant 0 : i32
    return %arg0, %c0_i32 : i32, i32
  }
  func.func @transform_1(%arg0: i32) -> (i32, i32) {
    %c0_i32 = arith.constant 0 : i32
    %c0_i32_0 = arith.constant 0 : i32
    return %arg0, %c0_i32 : i32, i32
  }
}

</mosaic_0001>

<llo_original>
// kernel: tpu_custom_call.1
$region0: #{tpu_custom_call.1}
  #allocation0 [shape = 'u32[]', space=smem, size = 0x4, offset = 0x4, fixed_abs, tag = 'smem constant byte address 0x4 - core index']
  #allocation1 [shape = 'u32[144,128]{1,0:T(1,128)}', space=vmem, size = 0x12000, scoped, tag = 'internal scratch']
  %s0 = inlined_call_operand.hbm [shape: f32[8,256], index: 0, kind: input, shape index: {}]
  %s1 = inlined_call_operand.hbm [shape: f32[8,49], index: 1, kind: output, shape index: {}]
  %s2 = sld [smem:[#allocation0]]
  $region18: #{tpu_custom_call.1} parent=0
    _
  %s4 = ssub.s32 1, %s2
  %s5 = scalar_select 0, %s4, %s2
  $region1: #{tpu_custom_call.1} parent=0
    #allocation2 [shape = 'u8[8192]{0}', space=vmem, size = 0x2000, scoped, tag = 'input window, operand 0, single buffered']
    #allocation3 [shape = 's32[1]{0}', space=sflag, size = 0x4, scoped, tag = 'scoped memory for tpu_custom_call.1']
    #allocation4 [shape = 's32[1]{0}', space=sflag, size = 0x4, scoped, tag = 'scoped memory for tpu_custom_call.1']
    #allocation5 [shape = 'u8[4096]{0}', space=vmem, size = 0x1000, scoped, tag = 'output window, operand 0, single buffered']
    %6 = vsyncpa [#allocation3], 0
    %7 = vsyncpa [#allocation4], 0
    // Predicated region
    $region2: #{tpu_custom_call.1} parent=1 // pred_check
      _
    $region3: #{tpu_custom_call.1} parent=1 // pred_check_branch
      %9 = sbr.rel (0) target = $region5
    $region4: #{tpu_custom_call.1} parent=1 // pred_region
      %s11 = ssub.s32 256, 256
      %12 = vsyncadd [#allocation3], %s11
      %s14 = sshll.u32 [#allocation2], 4
      %s15 = int_to_ptr.vmem [resolvable:$true] %s14
      %17 = dma.hbm_to_vmem [thread:$0]  %s0, 256, %s15, [#allocation3]
    $region5: #{tpu_custom_call.1} parent=1 // pred_fallthru
      _
    // Predicated region
    $region6: #{tpu_custom_call.1} parent=1 // pred_check
      _
    $region7: #{tpu_custom_call.1} parent=1 // pred_check_branch
      %19 = sbr.rel (0) target = $region9
    $region8: #{tpu_custom_call.1} parent=1 // pred_region
      %20 = dma.done [#allocation3], 256
    $region9: #{tpu_custom_call.1} parent=1 // pred_fallthru
      _
    %v21 = vld [vmem:[#allocation2] sm:$0xff]
    %v22 = vld [vmem:[#allocation2 + $0x8] sm:$0xff]
    %24 = vrot.lane.b32.xlu0 %v21, 112
    %v25 = vpop.permute.xlu0 %24
    %v27 = vmax.f32 %v21, %v25
    %28 = vrot.lane.b32.xlu0 %v21, 96
    %v29 = vpop.permute.xlu0 %28
    %v31 = vmax.f32 %v27, %v29
    %32 = vrot.lane.b32.xlu0 %v21, 80
    %v33 = vpop.permute.xlu0 %32
    %v35 = vmax.f32 %v31, %v33
    %36 = vrot.lane.b32.xlu0 %v21, 64
    %v37 = vpop.permute.xlu0 %36
    %v39 = vmax.f32 %v35, %v37
    %40 = vrot.lane.b32.xlu0 %v21, 48
    %v41 = vpop.permute.xlu0 %40
    %v43 = vmax.f32 %v39, %v41
    %44 = vrot.lane.b32.xlu0 %v21, 32
    %v45 = vpop.permute.xlu0 %44
    %v47 = vmax.f32 %v43, %v45
    %48 = vrot.lane.b32.xlu0 %v21, 16
    %v49 = vpop.permute.xlu0 %48
    %v51 = vmax.f32 %v47, %v49
    %vm52 = vcmask 64512
    %v53 = vsel %vm52, %v51, -inf
    %54 = vmax.xlane.f32.xlu0 %v53
    %v55 = vpop.xlane.xlu0 %54
    %vm56 = vcmask 7168
    %57 = vst.msk [vmem:[#allocation5] sm:$0xff] %vm56, %v55
    %vm58 = vcmask 130112
    %v59 = vsel %vm58, %v51, -inf
    %60 = vmax.xlane.f32.xlu0 %v59
    %v61 = vpop.xlane.xlu0 %60
    %vm62 = vcmask 15368
    %63 = vst.msk [vmem:[#allocation5] sm:$0xff] %vm62, %v61
    %65 = vrot.lane.b32.xlu0 %v22, 112
    %v66 = vpop.permute.xlu0 %65
    %v68 = vmax.f32 %v22, %v66
    %69 = vrot.lane.b32.xlu0 %v22, 96
    %v70 = vpop.permute.xlu0 %69
    %v72 = vmax.f32 %v68, %v70
    %73 = vrot.lane.b32.xlu0 %v22, 80
    %v74 = vpop.permute.xlu0 %73
    %v76 = vmax.f32 %v72, %v74
    %77 = vrot.lane.b32.xlu0 %v22, 64
    %v78 = vpop.permute.xlu0 %77
    %v80 = vmax.f32 %v76, %v78
    %81 = vrot.lane.b32.xlu0 %v22, 48
    %v82 = vpop.permute.xlu0 %81
    %v84 = vmax.f32 %v80, %v82
    %85 = vrot.lane.b32.xlu0 %v22, 32
    %v86 = vpop.permute.xlu0 %85
    %v88 = vmax.f32 %v84, %v86
    %89 = vrot.lane.b32.xlu0 %v22, 16
    %v90 = vpop.permute.xlu0 %89
    %v92 = vmax.f32 %v88, %v90
    %v93 = vsel %vm52, %v92, -inf
    %94 = vmax.xlane.f32.xlu0 %v93
    %v95 = vpop.xlane.xlu0 %94
    %vm96 = vcmask 23568
    %97 = vst.msk [vmem:[#allocation5] sm:$0xff] %vm96, %v95
    %v98 = vsel %vm58, %v92, -inf
    %99 = vmax.xlane.f32.xlu0 %v98
    %v100 = vpop.xlane.xlu0 %99
    %vm101 = vcmask 31768
    %102 = vst.msk [vmem:[#allocation5] sm:$0xff] %vm101, %v100
    %vm103 = vcmask 48128
    %v104 = vsel %vm103, %v43, -inf
    %105 = vmax.xlane.f32.xlu0 %v104
    %v106 = vpop.xlane.xlu0 %105
    %vm107 = vcmask 39968
    %108 = vst.msk [vmem:[#allocation5] sm:$0xff] %vm107, %v106
    %vm109 = vcmask 89128
    %v110 = vsel %vm109, %v43, -inf
    %111 = vmax.xlane.f32.xlu0 %v110
    %v112 = vpop.xlane.xlu0 %111
    %vm113 = vcmask 48168
    %114 = vst.msk [vmem:[#allocation5] sm:$0xff] %vm113, %v112
    %vm115 = vcmask 130128
    %v116 = vsel %vm115, %v43, -inf
    %117 = vmax.xlane.f32.xlu0 %v116
    %v118 = vpop.xlane.xlu0 %117
    %vm119 = vcmask 56368
    %120 = vst.msk [vmem:[#allocation5] sm:$0xff] %vm119, %v118
    %v121 = vmax.f32 %v31, %v74
    %v122 = vmax.f32 %v121, %v78
    %v123 = vmax.f32 %v122, %v82
    %vm124 = vcmask 704128
    %v125 = vsel %vm124, %v123, -inf
    %126 = vmax.xlane.f32.xlu0 %v125
    %v127 = vpop.xlane.xlu0 %126
    %vm128 = vcmask 64568
    %129 = vst.msk [vmem:[#allocation5] sm:$0xff] %vm128, %v127
    %vm130 = vcmask 745128
    %v131 = vsel %vm130, %v123, -inf
    %132 = vmax.xlane.f32.xlu0 %v131
    %v133 = vpop.xlane.xlu0 %132
    %vm134 = vcmask 72768
    %135 = vst.msk [vmem:[#allocation5] sm:$0xff] %vm134, %v133
    %vm136 = vcmask 786128
    %v137 = vsel %vm136, %v123, -inf
    %138 = vmax.xlane.f32.xlu0 %v137
    %v139 = vpop.xlane.xlu0 %138
    %vm140 = vcmask 80968
    %141 = vst.msk [vmem:[#allocation5] sm:$0xff] %vm140, %v139
    %vm142 = vcmask 310528
    %v143 = vsel %vm142, %v84, -inf
    %144 = vmax.xlane.f32.xlu0 %v143
    %v145 = vpop.xlane.xlu0 %144
    %vm146 = vcmask 89168
    %147 = vst.msk [vmem:[#allocation5] sm:$0xff] %vm146, %v145
    %vm148 = vcmask 351528
    %v149 = vsel %vm148, %v84, -inf
    %150 = vmax.xlane.f32.xlu0 %v149
    %v151 = vpop.xlane.xlu0 %150
    %vm152 = vcmask 97368
    %153 = vst.msk [vmem:[#allocation5] sm:$0xff] %vm152, %v151
    %vm154 = vcmask 392528
    %v155 = vsel %vm154, %v84, -inf
    %156 = vmax.xlane.f32.xlu0 %v155
    %v157 = vpop.xlane.xlu0 %156
    %vm158 = vcmask 105568
    %159 = vst.msk [vmem:[#allocation5] sm:$0xff] %vm158, %v157
    %vm160 = vcmask 23552
    %v161 = vsel %vm160, %v31, -inf
    %162 = vmax.xlane.f32.xlu0 %v161
    %v163 = vpop.xlane.xlu0 %162
    %vm164 = vcmask 113768
    %165 = vst.msk [vmem:[#allocation5] sm:$0xff] %vm164, %v163
    %vm166 = vcmask 48144
    %v167 = vsel %vm166, %v31, -inf
    %168 = vmax.xlane.f32.xlu0 %v167
    %v169 = vpop.xlane.xlu0 %168
    %vm170 = vcmask 121968
    %171 = vst.msk [vmem:[#allocation5] sm:$0xff] %vm170, %v169
    %vm172 = vcmask 64552
    %v173 = vsel %vm172, %v31, -inf
    %174 = vmax.xlane.f32.xlu0 %v173
    %v175 = vpop.xlane.xlu0 %174
    %vm176 = vcmask 130168
    %177 = vst.msk [vmem:[#allocation5] sm:$0xff] %vm176, %v175
    %vm178 = vcmask 89152
    %v179 = vsel %vm178, %v31, -inf
    %180 = vmax.xlane.f32.xlu0 %v179
    %v181 = vpop.xlane.xlu0 %180
    %vm182 = vcmask 138368
    %183 = vst.msk [vmem:[#allocation5] sm:$0xff] %vm182, %v181
    %vm184 = vcmask 113744
    %v185 = vsel %vm184, %v31, -inf
    %186 = vmax.xlane.f32.xlu0 %v185
    %v187 = vpop.xlane.xlu0 %186
    %vm188 = vcmask 146568
    %189 = vst.msk [vmem:[#allocation5] sm:$0xff] %vm188, %v187
    %vm190 = vcmask 130152
    %v191 = vsel %vm190, %v31, -inf
    %192 = vmax.xlane.f32.xlu0 %v191
    %v193 = vpop.xlane.xlu0 %192
    %vm194 = vcmask 154768
    %195 = vst.msk [vmem:[#allocation5] sm:$0xff] %vm194, %v193
    %vm196 = vcmask 285952
    %v197 = vsel %vm196, %v35, -inf
    %198 = vmax.xlane.f32.xlu0 %v197
    %v199 = vpop.xlane.xlu0 %198
    %vm200 = vcmask 162968
    %201 = vst.msk [vmem:[#allocation5] sm:$0xff] %vm200, %v199
    %vm202 = vcmask 310544
    %v203 = vsel %vm202, %v35, -inf
    %204 = vmax.xlane.f32.xlu0 %v203
    %v205 = vpop.xlane.xlu0 %204
    %vm206 = vcmask 171168
    %207 = vst.msk [vmem:[#allocation5] sm:$0xff] %vm206, %v205
    %vm208 = vcmask 326952
    %v209 = vsel %vm208, %v35, -inf
    %210 = vmax.xlane.f32.xlu0 %v209
    %v211 = vpop.xlane.xlu0 %210
    %vm212 = vcmask 179368
    %213 = vst.msk [vmem:[#allocation5] sm:$0xff] %vm212, %v211
    %vm214 = vcmask 351552
    %v215 = vsel %vm214, %v35, -inf
    %216 = vmax.xlane.f32.xlu0 %v215
    %v217 = vpop.xlane.xlu0 %216
    %vm218 = vcmask 187568
    %219 = vst.msk [vmem:[#allocation5] sm:$0xff] %vm218, %v217
    %vm220 = vcmask 376144
    %v221 = vsel %vm220, %v35, -inf
    %222 = vmax.xlane.f32.xlu0 %v221
    %v223 = vpop.xlane.xlu0 %222
    %vm224 = vcmask 195768
    %225 = vst.msk [vmem:[#allocation5] sm:$0xff] %vm224, %v223
    %vm226 = vcmask 392552
    %v227 = vsel %vm226, %v35, -inf
    %228 = vmax.xlane.f32.xlu0 %v227
    %v229 = vpop.xlane.xlu0 %228
    %vm230 = vcmask 203968
    %231 = vst.msk [vmem:[#allocation5] sm:$0xff] %vm230, %v229
    %vm232 = vcmask 679552
    %v233 = vsel %vm232, %v31, -inf
    %234 = vmax.xlane.f32.xlu0 %v233
    %v235 = vpop.xlane.xlu0 %234
    %vm236 = vcmask 212168
    %237 = vst.msk [vmem:[#allocation5] sm:$0xff] %vm236, %v235
    %vm238 = vcmask 704144
    %v239 = vsel %vm238, %v31, -inf
    %240 = vmax.xlane.f32.xlu0 %v239
    %v241 = vpop.xlane.xlu0 %240
    %vm242 = vcmask 220368
    %243 = vst.msk [vmem:[#allocation5] sm:$0xff] %vm242, %v241
    %vm244 = vcmask 720552
    %v245 = vsel %vm244, %v31, -inf
    %246 = vmax.xlane.f32.xlu0 %v245
    %v247 = vpop.xlane.xlu0 %246
    %vm248 = vcmask 228568
    %249 = vst.msk [vmem:[#allocation5] sm:$0xff] %vm248, %v247
    %vm250 = vcmask 745152
    %v251 = vsel %vm250, %v31, -inf
    %252 = vmax.xlane.f32.xlu0 %v251
    %v253 = vpop.xlane.xlu0 %252
    %vm254 = vcmask 236768
    %255 = vst.msk [vmem:[#allocation5] sm:$0xff] %vm254, %v253
    %vm256 = vcmask 769744
    %v257 = vsel %vm256, %v31, -inf
    %258 = vmax.xlane.f32.xlu0 %v257
    %v259 = vpop.xlane.xlu0 %258
    %vm260 = vcmask 244968
    %261 = vst.msk [vmem:[#allocation5] sm:$0xff] %vm260, %v259
    %vm262 = vcmask 786152
    %v263 = vsel %vm262, %v31, -inf
    %264 = vmax.xlane.f32.xlu0 %v263
    %v265 = vpop.xlane.xlu0 %264
    %vm266 = vcmask 253168
    %267 = vst.msk [vmem:[#allocation5] sm:$0xff] %vm266, %v265
    %v268 = vsel %vm160, %v72, -inf
    %269 = vmax.xlane.f32.xlu0 %v268
    %v270 = vpop.xlane.xlu0 %269
    %vm271 = vcmask 261368
    %272 = vst.msk [vmem:[#allocation5] sm:$0xff] %vm271, %v270
    %v273 = vsel %vm166, %v72, -inf
    %274 = vmax.xlane.f32.xlu0 %v273
    %v275 = vpop.xlane.xlu0 %274
    %vm276 = vcmask 269568
    %277 = vst.msk [vmem:[#allocation5] sm:$0xff] %vm276, %v275
    %v278 = vsel %vm172, %v72, -inf
    %279 = vmax.xlane.f32.xlu0 %v278
    %v280 = vpop.xlane.xlu0 %279
    %vm281 = vcmask 277768
    %282 = vst.msk [vmem:[#allocation5] sm:$0xff] %vm281, %v280
    %v283 = vsel %vm178, %v72, -inf
    %284 = vmax.xlane.f32.xlu0 %v283
    %v285 = vpop.xlane.xlu0 %284
    %vm286 = vcmask 285968
    %287 = vst.msk [vmem:[#allocation5] sm:$0xff] %vm286, %v285
    %v288 = vsel %vm184, %v72, -inf
    %289 = vmax.xlane.f32.xlu0 %v288
    %v290 = vpop.xlane.xlu0 %289
    %vm291 = vcmask 294168
    %292 = vst.msk [vmem:[#allocation5] sm:$0xff] %vm291, %v290
    %v293 = vsel %vm190, %v72, -inf
    %294 = vmax.xlane.f32.xlu0 %v293
    %v295 = vpop.xlane.xlu0 %294
    %vm296 = vcmask 302368
    %297 = vst.msk [vmem:[#allocation5] sm:$0xff] %vm296, %v295
    %v298 = vsel %vm196, %v76, -inf
    %299 = vmax.xlane.f32.xlu0 %v298
    %v300 = vpop.xlane.xlu0 %299
    %vm301 = vcmask 310568
    %302 = vst.msk [vmem:[#allocation5] sm:$0xff] %vm301, %v300
    %v303 = vsel %vm202, %v76, -inf
    %304 = vmax.xlane.f32.xlu0 %v303
    %v305 = vpop.xlane.xlu0 %304
    %vm306 = vcmask 318768
    %307 = vst.msk [vmem:[#allocation5] sm:$0xff] %vm306, %v305
    %v308 = vsel %vm208, %v76, -inf
    %309 = vmax.xlane.f32.xlu0 %v308
    %v310 = vpop.xlane.xlu0 %309
    %vm311 = vcmask 326968
    %312 = vst.msk [vmem:[#allocation5] sm:$0xff] %vm311, %v310
    %v313 = vsel %vm214, %v76, -inf
    %314 = vmax.xlane.f32.xlu0 %v313
    %v315 = vpop.xlane.xlu0 %314
    %vm316 = vcmask 335168
    %317 = vst.msk [vmem:[#allocation5] sm:$0xff] %vm316, %v315
    %v318 = vsel %vm220, %v76, -inf
    %319 = vmax.xlane.f32.xlu0 %v318
    %v320 = vpop.xlane.xlu0 %319
    %vm321 = vcmask 343368
    %322 = vst.msk [vmem:[#allocation5] sm:$0xff] %vm321, %v320
    %v323 = vsel %vm226, %v76, -inf
    %324 = vmax.xlane.f32.xlu0 %v323
    %v325 = vpop.xlane.xlu0 %324
    %vm326 = vcmask 351568
    %327 = vst.msk [vmem:[#allocation5] sm:$0xff] %vm326, %v325
    %v328 = vsel %vm232, %v72, -inf
    %329 = vmax.xlane.f32.xlu0 %v328
    %v330 = vpop.xlane.xlu0 %329
    %vm331 = vcmask 359768
    %332 = vst.msk [vmem:[#allocation5] sm:$0xff] %vm331, %v330
    %v333 = vsel %vm238, %v72, -inf
    %334 = vmax.xlane.f32.xlu0 %v333
    %v335 = vpop.xlane.xlu0 %334
    %vm336 = vcmask 367968
    %337 = vst.msk [vmem:[#allocation5] sm:$0xff] %vm336, %v335
    %v338 = vsel %vm244, %v72, -inf
    %339 = vmax.xlane.f32.xlu0 %v338
    %v340 = vpop.xlane.xlu0 %339
    %vm341 = vcmask 376168
    %342 = vst.msk [vmem:[#allocation5] sm:$0xff] %vm341, %v340
    %v343 = vsel %vm250, %v72, -inf
    %344 = vmax.xlane.f32.xlu0 %v343
    %v345 = vpop.xlane.xlu0 %344
    %vm346 = vcmask 384368
    %347 = vst.msk [vmem:[#allocation5] sm:$0xff] %vm346, %v345
    %v348 = vsel %vm256, %v72, -inf
    %349 = vmax.xlane.f32.xlu0 %v348
    %v350 = vpop.xlane.xlu0 %349
    %vm351 = vcmask 392568
    %352 = vst.msk [vmem:[#allocation5] sm:$0xff] %vm351, %v350
    %v353 = vsel %vm262, %v72, -inf
    %354 = vmax.xlane.f32.xlu0 %v353
    %v355 = vpop.xlane.xlu0 %354
    %vm356 = vcmask 400768
    %357 = vst.msk [vmem:[#allocation5] sm:$0xff] %vm356, %v355
    // Predicated region
    $region10: #{tpu_custom_call.1} parent=1 // pred_check
      _
    $region11: #{tpu_custom_call.1} parent=1 // pred_check_branch
      %359 = sbr.rel (0) target = $region13
    $region12: #{tpu_custom_call.1} parent=1 // pred_region
      %s361 = ssub.s32 128, 128
      %362 = vsyncadd [#allocation4], %s361
      %s364 = sshll.u32 [#allocation5], 4
      %s365 = int_to_ptr.vmem [resolvable:$true] %s364
      %367 = dma.vmem_to_hbm [thread:$0]  %s365, 128, %s1, [#allocation4]
    $region13: #{tpu_custom_call.1} parent=1 // pred_fallthru
      _
    // Predicated region
    $region14: #{tpu_custom_call.1} parent=1 // pred_check
      _
    $region15: #{tpu_custom_call.1} parent=1 // pred_check_branch
      %369 = sbr.rel (0) target = $region17
    $region16: #{tpu_custom_call.1} parent=1 // pred_region
      %370 = dma.done [#allocation4], 128
    $region17: #{tpu_custom_call.1} parent=1 // pred_fallthru
      _
    %371 = vsyncpa [#allocation3], 1
    %372 = vsyncpa [#allocation4], 1

</llo_original>
